<compile_context>
chip_gen: v6e
topology: v6e:2x2x1
jax: 0.10.0
libtpu: 0.0.40
codegen_flags: <defaults>
</compile_context>

<pallas_src>
import functools

import jax
import jax.numpy as jnp
from jax.experimental import pallas as pl
from jax.experimental.pallas import tpu as pltpu


def _addbmm_kernel(bias_ref, x1_ref, x2_ref, o_ref, acc_ref, *, alpha, beta, bt):
    k = pl.program_id(2)
    b = pl.program_id(3)

    @pl.when(jnp.logical_and(k == 0, b == 0))
    def _():
        acc_ref[...] = jnp.zeros_like(acc_ref)

    # Accumulate bt batched matmuls for this (tm, tp) output tile.
    partial = acc_ref[...]
    for i in range(bt):  # bt is a small compile-time constant -> unrolled
        partial = partial + jnp.dot(
            x1_ref[i], x2_ref[i], preferred_element_type=jnp.float32
        )
    acc_ref[...] = partial

    is_last = jnp.logical_and(
        k == pl.num_programs(2) - 1, b == pl.num_programs(3) - 1
    )

    @pl.when(is_last)
    def _():
        acc = acc_ref[...]
        if alpha != 1.0:          # trace-time constant: skip VALU work when 1.0
            acc = acc * alpha
        bias = bias_ref[...].astype(jnp.float32)
        if beta != 1.0:
            bias = bias * beta
        o_ref[...] = (acc + bias).astype(o_ref.dtype)


def _pick_tile(dim, target, multiple):
    """Largest tile <= target that is a multiple of `multiple` and divides dim.

    Falls back to the full dimension (always legal for Mosaic block shapes)."""
    if dim <= target:
        return dim
    t = (target // multiple) * multiple
    for cand in range(t, multiple - 1, -multiple):
        if dim % cand == 0:
            return cand
    return dim


def _pick_batch_block(B, target=8):
    for bt in range(min(B, target), 0, -1):
        if B % bt == 0:
            return bt
    return 1


def addbmm(bias, x1, x2, *, alpha=1.0, beta=1.0):
    """Pallas equivalent of bias.addbmm(x1, x2, alpha=alpha, beta=beta)."""
    B, M, K = x1.shape
    Bb, Kb, P = x2.shape
    assert B == Bb and K == Kb
    assert bias.shape == (M, P)

    # PyTorch follows type promotion of (bias, x1, x2).
    out_dtype = jnp.result_type(bias.dtype, x1.dtype, x2.dtype)

    if B == 0:
        # Grid would never run; addbmm returns beta * bias in this case.
        return (beta * bias.astype(jnp.float32)).astype(out_dtype)

    # Generation-friendly tile targets: lane-dense output (tp mult of 128),
    # MXU-friendly tm/tk; small problems just use the full dims.
    tm = _pick_tile(M, 256, 8)     # sublane dim of x1 block / out block
    tp = _pick_tile(P, 256, 128)   # lane dim of x2/out blocks
    tk = _pick_tile(K, 512, 128)   # lane dim of x1, sublane dim of x2
    bt = _pick_batch_block(B, 8)   # batches folded into one grid step

    nm, np_, nk, nb = M // tm, P // tp, K // tk, B // bt

    kernel = functools.partial(
        _addbmm_kernel, alpha=float(alpha), beta=float(beta), bt=bt
    )

    # Explicit VMEM budget (double-buffered inputs + acc + out), with headroom,
    # capped at v7x's 64 MiB physical VMEM.
    x1_b = jnp.dtype(x1.dtype).itemsize
    x2_b = jnp.dtype(x2.dtype).itemsize
    bias_b = jnp.dtype(bias.dtype).itemsize
    out_b = jnp.dtype(out_dtype).itemsize
    vmem_bytes = (
        2 * bt * tm * tk * x1_b
        + 2 * bt * tk * tp * x2_b
        + 2 * tm * tp * bias_b
        + 2 * tm * tp * out_b
        + tm * tp * 4
    )
    vmem_limit = int(min(64 * 2**20, max(32 * 2**20, int(vmem_bytes * 1.5))))

    cost = pl.CostEstimate(
        flops=2 * B * M * K * P,
        transcendentals=0,
        bytes_accessed=(
            B * M * K * x1_b + B * K * P * x2_b + M * P * bias_b + M * P * out_b
        ),
    )

    return pl.pallas_call(
        kernel,
        out_shape=jax.ShapeDtypeStruct((M, P), out_dtype),
        grid_spec=pltpu.PrefetchScalarGridSpec(
            num_scalar_prefetch=0,
            grid=(nm, np_, nk, nb),
            in_specs=[
                pl.BlockSpec((tm, tp), lambda i, j, k, b: (i, j)),        # bias
                pl.BlockSpec((bt, tm, tk), lambda i, j, k, b: (b, i, k)),  # x1
                pl.BlockSpec((bt, tk, tp), lambda i, j, k, b: (b, k, j)),  # x2
            ],
            out_specs=pl.BlockSpec((tm, tp), lambda i, j, k, b: (i, j)),
            scratch_shapes=[pltpu.VMEM((tm, tp), jnp.float32)],
        ),
        compiler_params=pltpu.CompilerParams(
            # M/P tiles are independent -> megacore sharding; K/batch reduce.
            dimension_semantics=("parallel", "parallel", "arbitrary", "arbitrary"),
            vmem_limit_bytes=vmem_limit,
        ),
        cost_estimate=cost,
    )(bias, x1, x2)


class AddBMMTensorMethodModule:
    """Mirror of the PyTorch module; no parameters in __init__."""

    def __init__(self, using_kwargs):
        self.using_kwargs = using_kwargs

    def __call__(self, bias, x1, x2):
        if self.using_kwargs:
            return addbmm(bias, x1, x2, alpha=2.0, beta=3.0)
        return addbmm(bias, x1, x2)


if __name__ == "__main__":
    key = jax.random.PRNGKey(0)
    kb, k1, k2 = jax.random.split(key, 3)

    B, M, K, P = 4, 16, 32, 64
    bias = jax.random.normal(kb, (M, P), dtype=jnp.float32)
    x1 = jax.random.normal(k1, (B, M, K), dtype=jnp.float32)
    x2 = jax.random.normal(k2, (B, K, P), dtype=jnp.float32)

    # default (using_kwargs=False): alpha=1, beta=1
    mod_default = AddBMMTensorMethodModule(using_kwargs=False)
    out_default = jax.block_until_ready(mod_default(bias, x1, x2))

    # kwargs path: alpha=2, beta=3
    mod_kwargs = AddBMMTensorMethodModule(using_kwargs=True)
    out_kwargs = jax.block_until_ready(mod_kwargs(bias, x1, x2))

    # reference check in plain JAX
    bmm_sum = jnp.sum(jnp.einsum("bmk,bkp->bmp", x1, x2), axis=0)
    ref_default = bias + bmm_sum
    ref_kwargs = 3.0 * bias + 2.0 * bmm_sum

    assert out_default.shape == (M, P) and out_kwargs.shape == (M, P)
    assert jnp.allclose(out_default, ref_default, atol=1e-4, rtol=1e-4)
    assert jnp.allclose(out_kwargs, ref_kwargs, atol=1e-4, rtol=1e-4)

    print("KERNEL_OK")
</pallas_src>

<mosaic_0001>
module attributes {stable_mosaic.version = 11 : i64} {
  func.func @_addbmm_kernel(%arg0: i32, %arg1: i32, %arg2: i32, %arg3: i32, %arg4: memref<16x64xf32, #tpu.memory_space<vmem>>, %arg5: memref<4x16x32xf32, #tpu.memory_space<vmem>>, %arg6: memref<4x32x64xf32, #tpu.memory_space<vmem>>, %arg7: memref<16x64xf32, #tpu.memory_space<vmem>>, %arg8: memref<16x64xf32, #tpu.memory_space<vmem>>) attributes {dimension_semantics = [#tpu.dimension_semantics<parallel>, #tpu.dimension_semantics<parallel>, #tpu.dimension_semantics<arbitrary>, #tpu.dimension_semantics<arbitrary>], iteration_bounds = array<i64: 1, 1, 1, 1>, scalar_prefetch = 0 : i64, scratch_operands = 1 : i64, tpu.core_type = #tpu.core_type<tc>, window_params = [{transform_indices = @transform_0, window_bounds = array<i64: 16, 64>}, {transform_indices = @transform_1, window_bounds = array<i64: 4, 16, 32>}, {transform_indices = @transform_2, window_bounds = array<i64: 4, 32, 64>}, {transform_indices = @transform_3, window_bounds = array<i64: 16, 64>}]} {
    %c0_i32 = arith.constant 0 : i32
    %0 = arith.cmpi eq, %arg2, %c0_i32 : i32
    %c0_i32_0 = arith.constant 0 : i32
    %1 = arith.cmpi eq, %arg3, %c0_i32_0 : i32
    %2 = arith.andi %0, %1 : i1
    %3 = arith.extui %2 : i1 to i32
    %c0_i32_1 = arith.constant 0 : i32
    %4 = arith.cmpi ne, %3, %c0_i32_1 : i32
    scf.if %4 {
      %cst_32 = arith.constant 0.000000e+00 : f32
      %36 = vector.broadcast %cst_32 : f32 to vector<16x64xf32>
      %c0_33 = arith.constant 0 : index
      %c0_34 = arith.constant 0 : index
      %37 = vector.load %arg8[%c0_33, %c0_34] : memref<16x64xf32, #tpu.memory_space<vmem>>, vector<16x64xf32>
      tpu.vector_store %arg8[%c0_33, %c0_34], %36 {strides = array<i32>} : memref<16x64xf32, #tpu.memory_space<vmem>>, vector<16x64xf32>,
    } else {
    }
    %c0 = arith.constant 0 : index
    %c0_2 = arith.constant 0 : index
    %5 = vector.load %arg8[%c0, %c0_2] : memref<16x64xf32, #tpu.memory_space<vmem>>, vector<16x64xf32>
    %c0_3 = arith.constant 0 : index
    %c0_4 = arith.constant 0 : index
    %c0_5 = arith.constant 0 : index
    %6 = vector.load %arg5[%c0_3, %c0_4, %c0_5] : memref<4x16x32xf32, #tpu.memory_space<vmem>>, vector<1x16x32xf32>
    %7 = vector.shape_cast %6 : vector<1x16x32xf32> to vector<16x32xf32>
    %c0_6 = arith.constant 0 : index
    %c0_7 = arith.constant 0 : index
    %c0_8 = arith.constant 0 : index
    %8 = vector.load %arg6[%c0_6, %c0_7, %c0_8] : memref<4x32x64xf32, #tpu.memory_space<vmem>>, vector<1x32x64xf32>
    %9 = vector.shape_cast %8 : vector<1x32x64xf32> to vector<32x64xf32>
    %cst = arith.constant dense<0.000000e+00> : vector<16x64xf32>
    %10 = tpu.matmul %7, %9, %cst {dimension_numbers = #tpu.dot_dimension_numbers<[1], [0], [0], [1], [0, 0, 1, 1], [], []>} : vector<16x32xf32>, vector<32x64xf32>, vector<16x64xf32> -> vector<16x64xf32>
    %11 = arith.addf %5, %10 : vector<16x64xf32>
    %c1 = arith.constant 1 : index
    %c0_9 = arith.constant 0 : index
    %c0_10 = arith.constant 0 : index
    %12 = vector.load %arg5[%c1, %c0_9, %c0_10] : memref<4x16x32xf32, #tpu.memory_space<vmem>>, vector<1x16x32xf32>
    %13 = vector.shape_cast %12 : vector<1x16x32xf32> to vector<16x32xf32>
    %c1_11 = arith.constant 1 : index
    %c0_12 = arith.constant 0 : index
    %c0_13 = arith.constant 0 : index
    %14 = vector.load %arg6[%c1_11, %c0_12, %c0_13] : memref<4x32x64xf32, #tpu.memory_space<vmem>>, vector<1x32x64xf32>
    %15 = vector.shape_cast %14 : vector<1x32x64xf32> to vector<32x64xf32>
    %cst_14 = arith.constant dense<0.000000e+00> : vector<16x64xf32>
    %16 = tpu.matmul %13, %15, %cst_14 {dimension_numbers = #tpu.dot_dimension_numbers<[1], [0], [0], [1], [0, 0, 1, 1], [], []>} : vector<16x32xf32>, vector<32x64xf32>, vector<16x64xf32> -> vector<16x64xf32>
    %17 = arith.addf %11, %16 : vector<16x64xf32>
    %c2 = arith.constant 2 : index
    %c0_15 = arith.constant 0 : index
    %c0_16 = arith.constant 0 : index
    %18 = vector.load %arg5[%c2, %c0_15, %c0_16] : memref<4x16x32xf32, #tpu.memory_space<vmem>>, vector<1x16x32xf32>
    %19 = vector.shape_cast %18 : vector<1x16x32xf32> to vector<16x32xf32>
    %c2_17 = arith.constant 2 : index
    %c0_18 = arith.constant 0 : index
    %c0_19 = arith.constant 0 : index
    %20 = vector.load %arg6[%c2_17, %c0_18, %c0_19] : memref<4x32x64xf32, #tpu.memory_space<vmem>>, vector<1x32x64xf32>
    %21 = vector.shape_cast %20 : vector<1x32x64xf32> to vector<32x64xf32>
    %cst_20 = arith.constant dense<0.000000e+00> : vector<16x64xf32>
    %22 = tpu.matmul %19, %21, %cst_20 {dimension_numbers = #tpu.dot_dimension_numbers<[1], [0], [0], [1], [0, 0, 1, 1], [], []>} : vector<16x32xf32>, vector<32x64xf32>, vector<16x64xf32> -> vector<16x64xf32>
    %23 = arith.addf %17, %22 : vector<16x64xf32>
    %c3 = arith.constant 3 : index
    %c0_21 = arith.constant 0 : index
    %c0_22 = arith.constant 0 : index
    %24 = vector.load %arg5[%c3, %c0_21, %c0_22] : memref<4x16x32xf32, #tpu.memory_space<vmem>>, vector<1x16x32xf32>
    %25 = vector.shape_cast %24 : vector<1x16x32xf32> to vector<16x32xf32>
    %c3_23 = arith.constant 3 : index
    %c0_24 = arith.constant 0 : index
    %c0_25 = arith.constant 0 : index
    %26 = vector.load %arg6[%c3_23, %c0_24, %c0_25] : memref<4x32x64xf32, #tpu.memory_space<vmem>>, vector<1x32x64xf32>
    %27 = vector.shape_cast %26 : vector<1x32x64xf32> to vector<32x64xf32>
    %cst_26 = arith.constant dense<0.000000e+00> : vector<16x64xf32>
    %28 = tpu.matmul %25, %27, %cst_26 {dimension_numbers = #tpu.dot_dimension_numbers<[1], [0], [0], [1], [0, 0, 1, 1], [], []>} : vector<16x32xf32>, vector<32x64xf32>, vector<16x64xf32> -> vector<16x64xf32>
    %29 = arith.addf %23, %28 : vector<16x64xf32>
    %c0_27 = arith.constant 0 : index
    %c0_28 = arith.constant 0 : index
    %30 = vector.load %arg8[%c0_27, %c0_28] : memref<16x64xf32, #tpu.memory_space<vmem>>, vector<16x64xf32>
    tpu.vector_store %arg8[%c0_27, %c0_28], %29 {strides = array<i32>} : memref<16x64xf32, #tpu.memory_space<vmem>>, vector<16x64xf32>,
    %c0_i32_29 = arith.constant 0 : i32
    %31 = arith.cmpi eq, %arg2, %c0_i32_29 : i32
    %c0_i32_30 = arith.constant 0 : i32
    %32 = arith.cmpi eq, %arg3, %c0_i32_30 : i32
    %33 = arith.andi %31, %32 : i1
    %34 = arith.extui %33 : i1 to i32
    %c0_i32_31 = arith.constant 0 : i32
    %35 = arith.cmpi ne, %34, %c0_i32_31 : i32
    scf.if %35 {
      %c0_32 = arith.constant 0 : index
      %c0_33 = arith.constant 0 : index
      %36 = vector.load %arg8[%c0_32, %c0_33] : memref<16x64xf32, #tpu.memory_space<vmem>>, vector<16x64xf32>
      %c0_34 = arith.constant 0 : index
      %c0_35 = arith.constant 0 : index
      %37 = vector.load %arg4[%c0_34, %c0_35] : memref<16x64xf32, #tpu.memory_space<vmem>>, vector<16x64xf32>
      %38 = arith.addf %36, %37 : vector<16x64xf32>
      %c0_36 = arith.constant 0 : index
      %c0_37 = arith.constant 0 : index
      %39 = vector.load %arg7[%c0_36, %c0_37] : memref<16x64xf32, #tpu.memory_space<vmem>>, vector<16x64xf32>
      tpu.vector_store %arg7[%c0_36, %c0_37], %38 {strides = array<i32>} : memref<16x64xf32, #tpu.memory_space<vmem>>, vector<16x64xf32>,
    } else {
    }
    return
  }
  func.func @transform_0(%arg0: i32, %arg1: i32, %arg2: i32, %arg3: i32) -> (i32, i32) {
    %c0_i32 = arith.constant 0 : i32
    return %arg0, %arg1 : i32, i32
  }
  func.func @transform_1(%arg0: i32, %arg1: i32, %arg2: i32, %arg3: i32) -> (i32, i32, i32) {
    %c0_i32 = arith.constant 0 : i32
    return %arg3, %arg0, %arg2 : i32, i32, i32
  }
  func.func @transform_2(%arg0: i32, %arg1: i32, %arg2: i32, %arg3: i32) -> (i32, i32, i32) {
    %c0_i32 = arith.constant 0 : i32
    return %arg3, %arg2, %arg1 : i32, i32, i32
  }
  func.func @transform_3(%arg0: i32, %arg1: i32, %arg2: i32, %arg3: i32) -> (i32, i32) {
    %c0_i32 = arith.constant 0 : i32
    return %arg0, %arg1 : i32, i32
  }
}

</mosaic_0001>

<llo_original>
// kernel: tpu_custom_call.1
$region0: #{tpu_custom_call.1}
  #allocation0 [shape = 'u32[]', space=smem, size = 0x4, offset = 0x4, fixed_abs, tag = 'smem constant byte address 0x4 - core index']
  #allocation1 [shape = 'u32[144,128]{1,0:T(1,128)}', space=vmem, size = 0x12000, scoped, tag = 'internal scratch']
  #allocation2 [shape = 'f32[16,64]{1,0:T(8,128)}', space=vmem, size = 0x2000, scoped, tag = 'scratch operand']
  %s0 = inlined_call_operand.hbm [shape: f32[16,64], index: 0, kind: input, shape index: {}]
  %s1 = inlined_call_operand.hbm [shape: f32[4,16,32], index: 1, kind: input, shape index: {}]
  %s2 = inlined_call_operand.hbm [shape: f32[4,32,64], index: 2, kind: input, shape index: {}]
  %s3 = inlined_call_operand.hbm [shape: f32[16,64], index: 3, kind: output, shape index: {}]
  %s4 = sld [smem:[#allocation0]]
  $region42: #{tpu_custom_call.1} parent=0
    _
  %s6 = ssub.s32 1, %s4
  %s7 = scalar_select 0, %s6, %s4
  $region1: #{tpu_custom_call.1} parent=0
    #allocation3 [shape = 'u8[8192]{0}', space=vmem, size = 0x2000, scoped, tag = 'input window, operand 0, single buffered']
    #allocation4 [shape = 's32[1]{0}', space=sflag, size = 0x4, scoped, tag = 'scoped memory for tpu_custom_call.1']
    #allocation5 [shape = 's32[1]{0}', space=sflag, size = 0x4, scoped, tag = 'scoped memory for tpu_custom_call.1']
    #allocation6 [shape = 'u8[32768]{0}', space=vmem, size = 0x8000, scoped, tag = 'input window, operand 1, single buffered']
    #allocation7 [shape = 's32[1]{0}', space=sflag, size = 0x4, scoped, tag = 'scoped memory for tpu_custom_call.1']
    #allocation8 [shape = 'u8[65536]{0}', space=vmem, size = 0x10000, scoped, tag = 'input window, operand 2, single buffered']
    #allocation9 [shape = 'u8[8192]{0}', space=vmem, size = 0x2000, scoped, tag = 'output window, operand 0, single buffered']
    %8 = vsyncpa [#allocation4], 0
    %9 = vsyncpa [#allocation7], 0
    %10 = vsyncpa [#allocation5], 0
    // Predicated region
    $region2: #{tpu_custom_call.1} parent=1 // pred_check
      _
    $region3: #{tpu_custom_call.1} parent=1 // pred_check_branch
      %12 = sbr.rel (0) target = $region5
    $region4: #{tpu_custom_call.1} parent=1 // pred_region
      %s14 = ssub.s32 256, 256
      %15 = vsyncadd [#allocation4], %s14
      %s16 = sshll.u32 [#allocation3], 4
      %s17 = int_to_ptr.vmem [resolvable:$true] %s16
      %22 = dma.hbm_to_vmem [thread:$0]  %s0, 256, %s17, [#allocation4], 128, 128, 8
    $region5: #{tpu_custom_call.1} parent=1 // pred_fallthru
      _
    // Predicated region
    $region6: #{tpu_custom_call.1} parent=1 // pred_check
      _
    $region7: #{tpu_custom_call.1} parent=1 // pred_check_branch
      %24 = sbr.rel (0) target = $region9
    $region8: #{tpu_custom_call.1} parent=1 // pred_region
      %s26 = ssub.s32 1024, 1024
      %27 = vsyncadd [#allocation7], %s26
      %s28 = sshll.u32 [#allocation6], 4
      %s29 = int_to_ptr.vmem [resolvable:$true] %s28
      %34 = dma.hbm_to_vmem [thread:$0]  %s1, 1024, %s29, [#allocation7], 128, 128, 8
    $region9: #{tpu_custom_call.1} parent=1 // pred_fallthru
      _
    // Predicated region
    $region10: #{tpu_custom_call.1} parent=1 // pred_check
      _
    $region11: #{tpu_custom_call.1} parent=1 // pred_check_branch
      %36 = sbr.rel (0) target = $region13
    $region12: #{tpu_custom_call.1} parent=1 // pred_region
      %s38 = ssub.s32 2048, 2048
      %39 = vsyncadd [#allocation7], %s38
      %s40 = sshll.u32 [#allocation8], 4
      %s41 = int_to_ptr.vmem [resolvable:$true] %s40
      %46 = dma.hbm_to_vmem [thread:$0]  %s2, 2048, %s41, [#allocation7], 128, 128, 8
    $region13: #{tpu_custom_call.1} parent=1 // pred_fallthru
      _
    // Predicated region
    $region14: #{tpu_custom_call.1} parent=1 // pred_check
      _
    $region15: #{tpu_custom_call.1} parent=1 // pred_check_branch
      %48 = sbr.rel (0) target = $region17
    $region16: #{tpu_custom_call.1} parent=1 // pred_region
      %49 = dma.done [#allocation4], 256
    $region17: #{tpu_custom_call.1} parent=1 // pred_fallthru
      _
    // Predicated region
    $region18: #{tpu_custom_call.1} parent=1 // pred_check
      _
    $region19: #{tpu_custom_call.1} parent=1 // pred_check_branch
      %51 = sbr.rel (0) target = $region21
    $region20: #{tpu_custom_call.1} parent=1 // pred_region
      %52 = dma.done [#allocation7], 1024
    $region21: #{tpu_custom_call.1} parent=1 // pred_fallthru
      _
    // Predicated region
    $region22: #{tpu_custom_call.1} parent=1 // pred_check
      _
    $region23: #{tpu_custom_call.1} parent=1 // pred_check_branch
      %54 = sbr.rel (0) target = $region25
    $region24: #{tpu_custom_call.1} parent=1 // pred_region
      %55 = dma.done [#allocation7], 2048
    $region25: #{tpu_custom_call.1} parent=1 // pred_fallthru
      _
    %p56 = scmp.eq.s32.totalorder 0, 0
    %p57 = scmp.eq.s32.totalorder 0, 0
    %p58 = pnand %p56, %p57
    %p59 = pneg %p58
    // Predicated region
    $region26: #{tpu_custom_call.1} parent=1 // pred_check
      _
    $region27: #{tpu_custom_call.1} parent=1 // pred_check_branch
      %61 = sbr.rel (%p58) target = $region29
    $region28: #{tpu_custom_call.1} parent=1 // pred_region
      %vm62 = vcmask 523264
      %63 = vst.msk [vmem:[#allocation2] sm:$0xff] %vm62, 0.0
      %64 = vst.msk [vmem:[#allocation2 + $0x8] sm:$0xff] %vm62, 0.0
    $region29: #{tpu_custom_call.1} parent=1 // pred_fallthru
      _
    %v65 = vld [vmem:[#allocation2] sm:$0xff]
    %v66 = vld [vmem:[#allocation2 + $0x8] sm:$0xff]
    %v67 = vld [vmem:[#allocation6] sm:$0xff]
    %v68 = vld [vmem:[#allocation6 + $0x8] sm:$0xff]
    %v69 = vld [vmem:[#allocation8] sm:$0xff]
    %v70 = vld [vmem:[#allocation8 + $0x8] sm:$0xff]
    %v71 = vld [vmem:[#allocation8 + $0x10] sm:$0xff]
    %v72 = vld [vmem:[#allocation8 + $0x18] sm:$0xff]
    %vm73 = vcmask 261120
    %v75 = vsel %vm73, %v67, 0
    %v78 = vsel %vm73, %v68, 0
    %80 = vmatprep.subr.mxu0 0.0
    %81 = vmatpush1.msra.mxu0 0.0
    %82 = vmatprep.subr.mxu0 0.0
    %83 = vmatpush1.msra.mxu0 0.0
    %84 = vmatprep.subr.mxu0 0.0
    %85 = vmatpush1.msra.mxu0 0.0
    %86 = vmatprep.subr.mxu0 0.0
    %87 = vmatpush1.msra.mxu0 0.0
    %88 = vmatprep.subr.mxu0 0.0
    %89 = vmatpush1.msra.mxu0 0.0
    %90 = vmatprep.subr.mxu0 0.0
    %91 = vmatpush1.msra.mxu0 0.0
    %92 = vmatprep.subr.mxu0 0.0
    %93 = vmatpush1.msra.mxu0 0.0
    %94 = vmatprep.subr.mxu0 0.0
    %95 = vmatpush1.msra.mxu0 0.0
    %96 = vmatprep.subr.mxu0 0.0
    %97 = vmatpush1.msra.mxu0 0.0
    %98 = vmatprep.subr.mxu0 0.0
    %99 = vmatpush1.msra.mxu0 0.0
    %100 = vmatprep.subr.mxu0 0.0
    %101 = vmatpush1.msra.mxu0 0.0
    %102 = vmatprep.subr.mxu0 0.0
    %103 = vmatpush1.msra.mxu0 0.0
    %104 = vmatprep.subr.mxu0 0.0
    %105 = vmatpush1.msra.mxu0 %v72
    %106 = vmatprep.subr.mxu0 0.0
    %107 = vmatpush1.msra.mxu0 %v71
    %108 = vmatprep.subr.mxu0 0.0
    %109 = vmatpush1.msra.mxu0 %v70
    %110 = vmatprep.subr.mxu0 0.0
    %111 = vmatpush1.msra.mxu0 %v69
    %112 = vmatprep.subr.mxu0 0.0
    %113 = vmatpush2.msra.mxu0 0.0
    %114 = vmatprep.subr.mxu0 0.0
    %115 = vmatpush2.msra.mxu0 0.0
    %116 = vmatprep.subr.mxu0 0.0
    %117 = vmatpush2.msra.mxu0 0.0
    %118 = vmatprep.subr.mxu0 0.0
    %119 = vmatpush2.msra.mxu0 0.0
    %120 = vmatprep.subr.mxu0 0.0
    %121 = vmatpush2.msra.mxu0 0.0
    %122 = vmatprep.subr.mxu0 0.0
    %123 = vmatpush2.msra.mxu0 0.0
    %124 = vmatprep.subr.mxu0 0.0
    %125 = vmatpush2.msra.mxu0 0.0
    %126 = vmatprep.subr.mxu0 0.0
    %127 = vmatpush2.msra.mxu0 0.0
    %128 = vmatprep.subr.mxu0 0.0
    %129 = vmatpush2.msra.mxu0 0.0
    %130 = vmatprep.subr.mxu0 0.0
    %131 = vmatpush2.msra.mxu0 0.0
    %132 = vmatprep.subr.mxu0 0.0
    %133 = vmatpush2.msra.mxu0 0.0
    %134 = vmatprep.subr.mxu0 0.0
    %135 = vmatpush2.msra.mxu0 0.0
    %136 = vmatprep.subr.mxu0 0.0
    %137 = vmatpush2.msra.mxu0 0.0
    %138 = vmatprep.subr.mxu0 0.0
    %139 = vmatpush2.msra.mxu0 0.0
    %140 = vmatprep.subr.mxu0 0.0
    %141 = vmatpush2.msra.mxu0 0.0
    %142 = vmatprep.subr.mxu0 0.0
    %143 = vmatpush2.msra.mxu0 0.0
    %144 = vmatprep.mubr.f32.mxu0 0.0
    %145 = vmatmul.mubr.f32.gmra.mxu0 %v75
    %v146 = vpop.f32.mrf.mxu0
    %v147 = vadd.f32 0.0, %v146
    %v148 = vpop.f32.mrf.mxu0
    %149 = vmatprep.mubr.f32.mxu0 0.0
    %150 = vmatmul.mubr.f32.gmra.mxu0 %v78
    %v151 = vpop.f32.mrf.mxu0
    %v152 = vadd.f32 0.0, %v151
    %v153 = vpop.f32.mrf.mxu0
    %154 = vdwg.mxu0
    %v155 = vadd.f32 %v65, %v147
    %v156 = vadd.f32 %v66, %v152
    %s157 = scalar_lea.vmem [#allocation6], 16
    %v158 = vld [vmem:[%s157] sm:$0xff]
    %v159 = vld [vmem:[%s157 + $0x8] sm:$0xff]
    %s160 = scalar_lea.vmem [#allocation8], 32
    %v161 = vld [vmem:[%s160] sm:$0xff]
    %v162 = vld [vmem:[%s160 + $0x8] sm:$0xff]
    %v163 = vld [vmem:[%s160 + $0x10] sm:$0xff]
    %v164 = vld [vmem:[%s160 + $0x18] sm:$0xff]
    %v166 = vsel %vm73, %v158, 0
    %v169 = vsel %vm73, %v159, 0
    %171 = vmatprep.subr.mxu0 0.0
    %172 = vmatpush1.msra.mxu0 0.0
    %173 = vmatprep.subr.mxu0 0.0
    %174 = vmatpush1.msra.mxu0 0.0
    %175 = vmatprep.subr.mxu0 0.0
    %176 = vmatpush1.msra.mxu0 0.0
    %177 = vmatprep.subr.mxu0 0.0
    %178 = vmatpush1.msra.mxu0 0.0
    %179 = vmatprep.subr.mxu0 0.0
    %180 = vmatpush1.msra.mxu0 0.0
    %181 = vmatprep.subr.mxu0 0.0
    %182 = vmatpush1.msra.mxu0 0.0
    %183 = vmatprep.subr.mxu0 0.0
    %184 = vmatpush1.msra.mxu0 0.0
    %185 = vmatprep.subr.mxu0 0.0
    %186 = vmatpush1.msra.mxu0 0.0
    %187 = vmatprep.subr.mxu0 0.0
    %188 = vmatpush1.msra.mxu0 0.0
    %189 = vmatprep.subr.mxu0 0.0
    %190 = vmatpush1.msra.mxu0 0.0
    %191 = vmatprep.subr.mxu0 0.0
    %192 = vmatpush1.msra.mxu0 0.0
    %193 = vmatprep.subr.mxu0 0.0
    %194 = vmatpush1.msra.mxu0 0.0
    %195 = vmatprep.subr.mxu0 0.0
    %196 = vmatpush1.msra.mxu0 %v164
    %197 = vmatprep.subr.mxu0 0.0
    %198 = vmatpush1.msra.mxu0 %v163
    %199 = vmatprep.subr.mxu0 0.0
    %200 = vmatpush1.msra.mxu0 %v162
    %201 = vmatprep.subr.mxu0 0.0
    %202 = vmatpush1.msra.mxu0 %v161
    %203 = vmatprep.subr.mxu0 0.0
    %204 = vmatpush2.msra.mxu0 0.0
    %205 = vmatprep.subr.mxu0 0.0
    %206 = vmatpush2.msra.mxu0 0.0
    %207 = vmatprep.subr.mxu0 0.0
    %208 = vmatpush2.msra.mxu0 0.0
    %209 = vmatprep.subr.mxu0 0.0
    %210 = vmatpush2.msra.mxu0 0.0
    %211 = vmatprep.subr.mxu0 0.0
    %212 = vmatpush2.msra.mxu0 0.0
    %213 = vmatprep.subr.mxu0 0.0
    %214 = vmatpush2.msra.mxu0 0.0
    %215 = vmatprep.subr.mxu0 0.0
    %216 = vmatpush2.msra.mxu0 0.0
    %217 = vmatprep.subr.mxu0 0.0
    %218 = vmatpush2.msra.mxu0 0.0
    %219 = vmatprep.subr.mxu0 0.0
    %220 = vmatpush2.msra.mxu0 0.0
    %221 = vmatprep.subr.mxu0 0.0
    %222 = vmatpush2.msra.mxu0 0.0
    %223 = vmatprep.subr.mxu0 0.0
    %224 = vmatpush2.msra.mxu0 0.0
    %225 = vmatprep.subr.mxu0 0.0
    %226 = vmatpush2.msra.mxu0 0.0
    %227 = vmatprep.subr.mxu0 0.0
    %228 = vmatpush2.msra.mxu0 0.0
    %229 = vmatprep.subr.mxu0 0.0
    %230 = vmatpush2.msra.mxu0 0.0
    %231 = vmatprep.subr.mxu0 0.0
    %232 = vmatpush2.msra.mxu0 0.0
    %233 = vmatprep.subr.mxu0 0.0
    %234 = vmatpush2.msra.mxu0 0.0
    %235 = vmatprep.mubr.f32.mxu0 0.0
    %236 = vmatmul.mubr.f32.gmra.mxu0 %v166
    %v237 = vpop.f32.mrf.mxu0
    %v238 = vadd.f32 0.0, %v237
    %v239 = vpop.f32.mrf.mxu0
    %240 = vmatprep.mubr.f32.mxu0 0.0
    %241 = vmatmul.mubr.f32.gmra.mxu0 %v169
    %v242 = vpop.f32.mrf.mxu0
    %v243 = vadd.f32 0.0, %v242
    %v244 = vpop.f32.mrf.mxu0
    %245 = vdwg.mxu0
    %v246 = vadd.f32 %v155, %v238
    %v247 = vadd.f32 %v156, %v243
    %s248 = scalar_lea.vmem [#allocation6], 32
    %v249 = vld [vmem:[%s248] sm:$0xff]
    %v250 = vld [vmem:[%s248 + $0x8] sm:$0xff]
    %s251 = scalar_lea.vmem [#allocation8], 64
    %v252 = vld [vmem:[%s251] sm:$0xff]
    %v253 = vld [vmem:[%s251 + $0x8] sm:$0xff]
    %v254 = vld [vmem:[%s251 + $0x10] sm:$0xff]
    %v255 = vld [vmem:[%s251 + $0x18] sm:$0xff]
    %v257 = vsel %vm73, %v249, 0
    %v260 = vsel %vm73, %v250, 0
    %262 = vmatprep.subr.mxu0 0.0
    %263 = vmatpush1.msra.mxu0 0.0
    %264 = vmatprep.subr.mxu0 0.0
    %265 = vmatpush1.msra.mxu0 0.0
    %266 = vmatprep.subr.mxu0 0.0
    %267 = vmatpush1.msra.mxu0 0.0
    %268 = vmatprep.subr.mxu0 0.0
    %269 = vmatpush1.msra.mxu0 0.0
    %270 = vmatprep.subr.mxu0 0.0
    %271 = vmatpush1.msra.mxu0 0.0
    %272 = vmatprep.subr.mxu0 0.0
    %273 = vmatpush1.msra.mxu0 0.0
    %274 = vmatprep.subr.mxu0 0.0
    %275 = vmatpush1.msra.mxu0 0.0
    %276 = vmatprep.subr.mxu0 0.0
    %277 = vmatpush1.msra.mxu0 0.0
    %278 = vmatprep.subr.mxu0 0.0
    %279 = vmatpush1.msra.mxu0 0.0
    %280 = vmatprep.subr.mxu0 0.0
    %281 = vmatpush1.msra.mxu0 0.0
    %282 = vmatprep.subr.mxu0 0.0
    %283 = vmatpush1.msra.mxu0 0.0
    %284 = vmatprep.subr.mxu0 0.0
    %285 = vmatpush1.msra.mxu0 0.0
    %286 = vmatprep.subr.mxu0 0.0
    %287 = vmatpush1.msra.mxu0 %v255
    %288 = vmatprep.subr.mxu0 0.0
    %289 = vmatpush1.msra.mxu0 %v254
    %290 = vmatprep.subr.mxu0 0.0
    %291 = vmatpush1.msra.mxu0 %v253
    %292 = vmatprep.subr.mxu0 0.0
    %293 = vmatpush1.msra.mxu0 %v252
    %294 = vmatprep.subr.mxu0 0.0
    %295 = vmatpush2.msra.mxu0 0.0
    %296 = vmatprep.subr.mxu0 0.0
    %297 = vmatpush2.msra.mxu0 0.0
    %298 = vmatprep.subr.mxu0 0.0
    %299 = vmatpush2.msra.mxu0 0.0
    %300 = vmatprep.subr.mxu0 0.0
    %301 = vmatpush2.msra.mxu0 0.0
    %302 = vmatprep.subr.mxu0 0.0
    %303 = vmatpush2.msra.mxu0 0.0
    %304 = vmatprep.subr.mxu0 0.0
    %305 = vmatpush2.msra.mxu0 0.0
    %306 = vmatprep.subr.mxu0 0.0
    %307 = vmatpush2.msra.mxu0 0.0
    %308 = vmatprep.subr.mxu0 0.0
    %309 = vmatpush2.msra.mxu0 0.0
    %310 = vmatprep.subr.mxu0 0.0
    %311 = vmatpush2.msra.mxu0 0.0
    %312 = vmatprep.subr.mxu0 0.0
    %313 = vmatpush2.msra.mxu0 0.0
    %314 = vmatprep.subr.mxu0 0.0
    %315 = vmatpush2.msra.mxu0 0.0
    %316 = vmatprep.subr.mxu0 0.0
    %317 = vmatpush2.msra.mxu0 0.0
    %318 = vmatprep.subr.mxu0 0.0
    %319 = vmatpush2.msra.mxu0 0.0
    %320 = vmatprep.subr.mxu0 0.0
    %321 = vmatpush2.msra.mxu0 0.0
    %322 = vmatprep.subr.mxu0 0.0
    %323 = vmatpush2.msra.mxu0 0.0
    %324 = vmatprep.subr.mxu0 0.0
    %325 = vmatpush2.msra.mxu0 0.0
    %326 = vmatprep.mubr.f32.mxu0 0.0
    %327 = vmatmul.mubr.f32.gmra.mxu0 %v257
    %v328 = vpop.f32.mrf.mxu0
    %v329 = vadd.f32 0.0, %v328
    %v330 = vpop.f32.mrf.mxu0
    %331 = vmatprep.mubr.f32.mxu0 0.0
    %332 = vmatmul.mubr.f32.gmra.mxu0 %v260
    %v333 = vpop.f32.mrf.mxu0
    %v334 = vadd.f32 0.0, %v333
    %v335 = vpop.f32.mrf.mxu0
    %336 = vdwg.mxu0
    %v337 = vadd.f32 %v246, %v329
    %v338 = vadd.f32 %v247, %v334
    %s339 = scalar_lea.vmem [#allocation6], 48
    %v340 = vld [vmem:[%s339] sm:$0xff]
    %v341 = vld [vmem:[%s339 + $0x8] sm:$0xff]
    %s342 = scalar_lea.vmem [#allocation8], 96
    %v343 = vld [vmem:[%s342] sm:$0xff]
    %v344 = vld [vmem:[%s342 + $0x8] sm:$0xff]
    %v345 = vld [vmem:[%s342 + $0x10] sm:$0xff]
    %v346 = vld [vmem:[%s342 + $0x18] sm:$0xff]
    %v348 = vsel %vm73, %v340, 0
    %v351 = vsel %vm73, %v341, 0
    %353 = vmatprep.subr.mxu0 0.0
    %354 = vmatpush1.msra.mxu0 0.0
    %355 = vmatprep.subr.mxu0 0.0
    %356 = vmatpush1.msra.mxu0 0.0
    %357 = vmatprep.subr.mxu0 0.0
    %358 = vmatpush1.msra.mxu0 0.0
    %359 = vmatprep.subr.mxu0 0.0
    %360 = vmatpush1.msra.mxu0 0.0
    %361 = vmatprep.subr.mxu0 0.0
    %362 = vmatpush1.msra.mxu0 0.0
    %363 = vmatprep.subr.mxu0 0.0
    %364 = vmatpush1.msra.mxu0 0.0
    %365 = vmatprep.subr.mxu0 0.0
    %366 = vmatpush1.msra.mxu0 0.0
    %367 = vmatprep.subr.mxu0 0.0
    %368 = vmatpush1.msra.mxu0 0.0
    %369 = vmatprep.subr.mxu0 0.0
    %370 = vmatpush1.msra.mxu0 0.0
    %371 = vmatprep.subr.mxu0 0.0
    %372 = vmatpush1.msra.mxu0 0.0
    %373 = vmatprep.subr.mxu0 0.0
    %374 = vmatpush1.msra.mxu0 0.0
    %375 = vmatprep.subr.mxu0 0.0
    %376 = vmatpush1.msra.mxu0 0.0
    %377 = vmatprep.subr.mxu0 0.0
    %378 = vmatpush1.msra.mxu0 %v346
    %379 = vmatprep.subr.mxu0 0.0
    %380 = vmatpush1.msra.mxu0 %v345
    %381 = vmatprep.subr.mxu0 0.0
    %382 = vmatpush1.msra.mxu0 %v344
    %383 = vmatprep.subr.mxu0 0.0
    %384 = vmatpush1.msra.mxu0 %v343
    %385 = vmatprep.subr.mxu0 0.0
    %386 = vmatpush2.msra.mxu0 0.0
    %387 = vmatprep.subr.mxu0 0.0
    %388 = vmatpush2.msra.mxu0 0.0
    %389 = vmatprep.subr.mxu0 0.0
    %390 = vmatpush2.msra.mxu0 0.0
    %391 = vmatprep.subr.mxu0 0.0
    %392 = vmatpush2.msra.mxu0 0.0
    %393 = vmatprep.subr.mxu0 0.0
    %394 = vmatpush2.msra.mxu0 0.0
    %395 = vmatprep.subr.mxu0 0.0
    %396 = vmatpush2.msra.mxu0 0.0
    %397 = vmatprep.subr.mxu0 0.0
    %398 = vmatpush2.msra.mxu0 0.0
    %399 = vmatprep.subr.mxu0 0.0
    %400 = vmatpush2.msra.mxu0 0.0
    %401 = vmatprep.subr.mxu0 0.0
    %402 = vmatpush2.msra.mxu0 0.0
    %403 = vmatprep.subr.mxu0 0.0
    %404 = vmatpush2.msra.mxu0 0.0
    %405 = vmatprep.subr.mxu0 0.0
    %406 = vmatpush2.msra.mxu0 0.0
    %407 = vmatprep.subr.mxu0 0.0
    %408 = vmatpush2.msra.mxu0 0.0
    %409 = vmatprep.subr.mxu0 0.0
    %410 = vmatpush2.msra.mxu0 0.0
    %411 = vmatprep.subr.mxu0 0.0
    %412 = vmatpush2.msra.mxu0 0.0
    %413 = vmatprep.subr.mxu0 0.0
    %414 = vmatpush2.msra.mxu0 0.0
    %415 = vmatprep.subr.mxu0 0.0
    %416 = vmatpush2.msra.mxu0 0.0
    %417 = vmatprep.mubr.f32.mxu0 0.0
    %418 = vmatmul.mubr.f32.gmra.mxu0 %v348
    %v419 = vpop.f32.mrf.mxu0
    %v420 = vadd.f32 0.0, %v419
    %v421 = vpop.f32.mrf.mxu0
    %422 = vmatprep.mubr.f32.mxu0 0.0
    %423 = vmatmul.mubr.f32.gmra.mxu0 %v351
    %v424 = vpop.f32.mrf.mxu0
    %v425 = vadd.f32 0.0, %v424
    %v426 = vpop.f32.mrf.mxu0
    %427 = vdwg.mxu0
    %v428 = vadd.f32 %v337, %v420
    %v429 = vadd.f32 %v338, %v425
    %vm430 = vcmask 523264
    %431 = vst.msk [vmem:[#allocation2] sm:$0xff] %vm430, %v428
    %432 = vst.msk [vmem:[#allocation2 + $0x8] sm:$0xff] %vm430, %v429
    // Predicated region
    $region30: #{tpu_custom_call.1} parent=1 // pred_check
      _
    $region31: #{tpu_custom_call.1} parent=1 // pred_check_branch
      %434 = sbr.rel (%p58) target = $region33
    $region32: #{tpu_custom_call.1} parent=1 // pred_region
      %v435 = vld [vmem:[#allocation2] sm:$0xff]
      %v436 = vld [vmem:[#allocation2 + $0x8] sm:$0xff]
      %v437 = vld [vmem:[#allocation3] sm:$0xff]
      %v438 = vld [vmem:[#allocation3 + $0x8] sm:$0xff]
      %v439 = vadd.f32 %v435, %v437
      %v440 = vadd.f32 %v436, %v438
      %441 = vst.msk [vmem:[#allocation9] sm:$0xff] %vm430, %v439
      %442 = vst.msk [vmem:[#allocation9 + $0x8] sm:$0xff] %vm430, %v440
    $region33: #{tpu_custom_call.1} parent=1 // pred_fallthru
      _
    // Predicated region
    $region34: #{tpu_custom_call.1} parent=1 // pred_check
      _
    $region35: #{tpu_custom_call.1} parent=1 // pred_check_branch
      %444 = sbr.rel (0) target = $region37
    $region36: #{tpu_custom_call.1} parent=1 // pred_region
      %s446 = ssub.s32 256, 256
      %447 = vsyncadd [#allocation5], %s446
      %s448 = sshll.u32 [#allocation9], 4
      %s449 = int_to_ptr.vmem [resolvable:$true] %s448
      %454 = dma.vmem_to_hbm [thread:$0]  %s449, 256, %s3, [#allocation5], 128, 128, 8
    $region37: #{tpu_custom_call.1} parent=1 // pred_fallthru
      _
    // Predicated region
    $region38: #{tpu_custom_call.1} parent=1 // pred_check
      _
    $region39: #{tpu_custom_call.1} parent=1 // pred_check_branch
      %456 = sbr.rel (0) target = $region41
    $region40: #{tpu_custom_call.1} parent=1 // pred_region
      %457 = dma.done [#allocation5], 256
    $region41: #{tpu_custom_call.1} parent=1 // pred_fallthru
      _
    %458 = vsyncpa [#allocation4], 1
    %459 = vsyncpa [#allocation7], 1
    %460 = vsyncpa [#allocation5], 1

</llo_original>
